<compile_context>
chip_gen: v7x
topology: tpu7x:2x2x1
jax: 0.10.0
libtpu: 0.0.40
codegen_flags: <defaults>
</compile_context>

<pallas_src>
import functools

import jax
import jax.numpy as jnp
from jax.experimental import pallas as pl
from jax.experimental.pallas import tpu as pltpu


def _focal_loss_kernel(x_ref, t_ref, a_ref, out_ref, *,
                       gamma, confidence, off_value, scale, n_valid,
                       tile_n, tiles_per_core):
    core = pl.program_id(0)
    step = pl.program_id(1)

    @pl.when(step == 0)
    def _init():
        out_ref[...] = jnp.zeros_like(out_ref)

    x = x_ref[...].astype(jnp.float32)   # (TILE_N, C) logits, upcast in-kernel
    t = t_ref[...]                       # (TILE_N, 1) int32 targets
    a_sel = a_ref[...]                   # (TILE_N, 1) f32   alpha[targets] (wrapper gather)

    tn, c = x.shape

    # Row-stable exp; softmax never materialized.
    m = jnp.max(x, axis=1, keepdims=True)
    e = jnp.exp(x - m)                                     # (TILE_N, C)
    z = jnp.sum(e, axis=1, keepdims=True)                  # (TILE_N, 1)

    # Only remaining full-width VALU work: select e at the target column.
    col = jax.lax.broadcasted_iota(jnp.int32, (tn, c), 1)
    e_t = jnp.sum(jnp.where(col == t, e, 0.0), axis=1, keepdims=True)   # (TILE_N, 1)

    # sum(P * class_mask) = off + (conf - off) * softmax[target]   (per-row scalars)
    probs = off_value + (confidence - off_value) * (e_t / z)
    probs = jnp.clip(probs, jnp.finfo(jnp.float32).tiny, 1.0)  # NaN/inf guard (deliberate deviation on underflow)
    log_p = jnp.log(probs)
    one_minus = 1.0 - probs

    g = float(gamma)
    if g.is_integer() and g >= 0:
        focal = jax.lax.integer_pow(one_minus, int(g))     # VPU muls, no EUP exp/log
    else:
        focal = jnp.power(one_minus, g)

    loss_rows = -a_sel * focal * log_p                     # (TILE_N, 1)

    # Zero OOB-garbage rows (ragged last block, phantom tiles on the short core).
    tile = core * tiles_per_core + step
    row = jax.lax.broadcasted_iota(jnp.int32, (tn, 1), 0) + tile * tile_n
    loss_rows = jnp.where(row < n_valid, loss_rows, 0.0)

    # Accumulate into this core's resident (8, 128) output block.
    # `scale` is 1/N for size_average=True, else 1.0.
    out_ref[...] = out_ref[...] + jnp.sum(loss_rows) * scale


def focal_loss(inputs, targets, alpha, *, class_num, gamma=2.0,
               size_average=True, smoothing=0.0, tile_n=None):
    """inputs: (N, C) logits (any float dtype); targets: (N,) int; alpha: (C,) f32."""
    n, c = inputs.shape
    assert c == class_num
    confidence = 1.0 - smoothing
    off_value = smoothing / (class_num - 1) if class_num > 1 else 0.0

    itemsize = jnp.dtype(inputs.dtype).itemsize

    # Tile sizing keyed to the f32 *in-kernel* working set (~2 MiB per block),
    # independent of the HBM dtype.  No artificial row cap.
    n_r8 = ((n + 7) // 8) * 8
    if tile_n is None:
        budget_f32 = 2 * 1024 * 1024
        tile_n = budget_f32 // max(1, c * 4)
    tile_n = max(8, (int(tile_n) // 8) * 8)
    tile_n = min(tile_n, n_r8)

    num_tiles = (n + tile_n - 1) // tile_n
    num_cores = 2 if num_tiles > 1 else 1          # v7x megacore split; no-op on v5e/v6e
    tiles_per_core = (num_tiles + num_cores - 1) // num_cores
    last_tile = num_tiles - 1

    # Small (N,) side inputs only — NO pad / copy of the (N, C) logits.
    t2 = targets.astype(jnp.int32).reshape(n, 1)
    a_sel = alpha.astype(jnp.float32)[targets].reshape(n, 1)

    scale = (1.0 / n) if size_average else 1.0

    kernel = functools.partial(
        _focal_loss_kernel,
        gamma=float(gamma),
        confidence=float(confidence),
        off_value=float(off_value),
        scale=float(scale),
        n_valid=n,
        tile_n=tile_n,
        tiles_per_core=tiles_per_core,
    )

    def data_map(core, i):
        # Clamp phantom tiles (odd tile count on the 2nd core) to a valid block;
        # their rows are fully masked in-kernel, so the data is never used.
        return (jnp.minimum(core * tiles_per_core + i, last_tile), 0)

    # VMEM: 2x double-buffered logits block + ~8 full-width f32/i32 temporaries.
    in_block_bytes = tile_n * c * itemsize
    f32_block_bytes = tile_n * c * 4
    vmem_limit = int(min(max(3 * in_block_bytes + 8 * f32_block_bytes + (2 << 20),
                             16 << 20), 48 << 20))

    cost = pl.CostEstimate(
        flops=8 * n * c,
        transcendentals=n * c + 2 * n,       # exp per element, log + div per row
        bytes_accessed=n * c * itemsize + 8 * n + num_cores * 8 * 128 * 4,
    )

    out = pl.pallas_call(
        kernel,
        out_shape=jax.ShapeDtypeStruct((8 * num_cores, 128), jnp.float32),
        grid_spec=pltpu.PrefetchScalarGridSpec(
            num_scalar_prefetch=0,
            grid=(num_cores, tiles_per_core),
            in_specs=[
                pl.BlockSpec((tile_n, c), data_map),   # logits tile (native dtype)
                pl.BlockSpec((tile_n, 1), data_map),   # targets tile
                pl.BlockSpec((tile_n, 1), data_map),   # alpha[targets] tile
            ],
            out_specs=pl.BlockSpec((8, 128), lambda core, i: (core, 0)),  # per-core resident acc
        ),
        compiler_params=pltpu.CompilerParams(
            dimension_semantics=("parallel", "arbitrary"),
            vmem_limit_bytes=vmem_limit),
        cost_estimate=cost,
    )(inputs, t2, a_sel)

    # Sum the per-core partial sums (every element of a core's block holds it).
    return jnp.sum(out[::8, 0])


def _reference_focal_loss(inputs, targets, alpha, *, class_num, gamma,
                          size_average, smoothing):
    confidence = 1.0 - smoothing
    off = smoothing / (class_num - 1) if class_num > 1 else 0.0
    p = jax.nn.softmax(inputs.astype(jnp.float32), axis=1)
    n, c = inputs.shape
    mask = jnp.full((n, c), off, dtype=jnp.float32)
    mask = mask.at[jnp.arange(n), targets].set(confidence)
    a_sel = alpha[targets].reshape(n, 1)
    probs = jnp.sum(p * mask, axis=1, keepdims=True)
    bl = -a_sel * jnp.power(1.0 - probs, gamma) * jnp.log(probs)
    return jnp.mean(bl) if size_average else jnp.sum(bl)


if __name__ == "__main__":
    key = jax.random.PRNGKey(0)
    N, C = 12, 32            # non-multiple-of-tile batch -> exercises pad-free ragged block
    gamma = 2.0
    smoothing = 0.1

    k1, k2 = jax.random.split(key)
    inputs = jax.random.normal(k1, (N, C), dtype=jnp.float32)
    targets = jax.random.randint(k2, (N,), 0, C, dtype=jnp.int32)
    # alpha=None path of the module -> ones(class_num, 1); deterministic.
    alpha = jnp.ones((C,), dtype=jnp.float32)

    # Tiled path: tile_n=8 -> 2 tiles, 2-core grid, ragged last block, mean reduction.
    loss = focal_loss(inputs, targets, alpha, class_num=C, gamma=gamma,
                      size_average=True, smoothing=smoothing, tile_n=8)
    loss = jax.block_until_ready(loss)
    ref = _reference_focal_loss(inputs, targets, alpha, class_num=C, gamma=gamma,
                                size_average=True, smoothing=smoothing)
    assert jnp.allclose(loss, ref, rtol=1e-5, atol=1e-5), (loss, ref)

    # Auto-tile path: single ragged block, single core, sum reduction.
    loss2 = focal_loss(inputs, targets, alpha, class_num=C, gamma=gamma,
                       size_average=False, smoothing=smoothing)
    loss2 = jax.block_until_ready(loss2)
    ref2 = _reference_focal_loss(inputs, targets, alpha, class_num=C, gamma=gamma,
                                 size_average=False, smoothing=smoothing)
    assert jnp.allclose(loss2, ref2, rtol=1e-5, atol=1e-5), (loss2, ref2)

    print("KERNEL_OK")
</pallas_src>

<mosaic_0001>
module attributes {stable_mosaic.version = 11 : i64} {
  func.func @_focal_loss_kernel(%arg0: i32, %arg1: i32, %arg2: memref<8x32xf32, #tpu.memory_space<vmem>>, %arg3: memref<8x1xi32, #tpu.memory_space<vmem>>, %arg4: memref<8x1xf32, #tpu.memory_space<vmem>>, %arg5: memref<8x128xf32, #tpu.memory_space<vmem>>) attributes {dimension_semantics = [#tpu.dimension_semantics<parallel>, #tpu.dimension_semantics<arbitrary>], iteration_bounds = array<i64: 2, 1>, scalar_prefetch = 0 : i64, scratch_operands = 0 : i64, tpu.core_type = #tpu.core_type<tc>, window_params = [{transform_indices = @transform_0, window_bounds = array<i64: 8, 32>}, {transform_indices = @transform_1, window_bounds = array<i64: 8, 1>}, {transform_indices = @transform_2, window_bounds = array<i64: 8, 1>}, {transform_indices = @transform_3, window_bounds = array<i64: 8, 128>}]} {
    %c0_i32 = arith.constant 0 : i32
    %0 = arith.cmpi eq, %arg1, %c0_i32 : i32
    %1 = arith.extui %0 : i1 to i32
    %c0_i32_0 = arith.constant 0 : i32
    %2 = arith.cmpi ne, %1, %c0_i32_0 : i32
    scf.if %2 {
      %cst_22 = arith.constant 0.000000e+00 : f32
      %56 = vector.broadcast %cst_22 : f32 to vector<8x128xf32>
      %c0_23 = arith.constant 0 : index
      %c0_24 = arith.constant 0 : index
      %57 = vector.load %arg5[%c0_23, %c0_24] : memref<8x128xf32, #tpu.memory_space<vmem>>, vector<8x128xf32>
      tpu.vector_store %arg5[%c0_23, %c0_24], %56 {strides = array<i32>} : memref<8x128xf32, #tpu.memory_space<vmem>>, vector<8x128xf32>,
    } else {
    }
    %c0 = arith.constant 0 : index
    %c0_1 = arith.constant 0 : index
    %3 = vector.load %arg2[%c0, %c0_1] : memref<8x32xf32, #tpu.memory_space<vmem>>, vector<8x32xf32>
    %c0_2 = arith.constant 0 : index
    %c0_3 = arith.constant 0 : index
    %4 = vector.load %arg3[%c0_2, %c0_3] : memref<8x1xi32, #tpu.memory_space<vmem>>, vector<8x1xi32>
    %c0_4 = arith.constant 0 : index
    %c0_5 = arith.constant 0 : index
    %5 = vector.load %arg4[%c0_4, %c0_5] : memref<8x1xf32, #tpu.memory_space<vmem>>, vector<8x1xf32>
    %cst = arith.constant dense<0xFF800000> : vector<8xf32>
    %6 = vector.multi_reduction <maximumf>, %3, %cst [1] : vector<8x32xf32> to vector<8xf32>
    %7 = vector.shape_cast %6 : vector<8xf32> to vector<8x1xf32>
    %8 = vector.broadcast %7 : vector<8x1xf32> to vector<8x32xf32>
    %9 = arith.subf %3, %8 : vector<8x32xf32>
    %10 = math.exp %9 : vector<8x32xf32>
    %cst_6 = arith.constant dense<0.000000e+00> : vector<8xf32>
    %11 = vector.multi_reduction <add>, %10, %cst_6 [1] : vector<8x32xf32> to vector<8xf32>
    %12 = vector.shape_cast %11 : vector<8xf32> to vector<8x1xf32>
    %13 = tpu.iota {dimensions = array<i32: 1>} : vector<8x32xi32>
    %14 = vector.broadcast %4 : vector<8x1xi32> to vector<8x32xi32>
    %15 = arith.cmpi eq, %13, %14 : vector<8x32xi32>
    %cst_7 = arith.constant 0.000000e+00 : f32
    %16 = vector.broadcast %cst_7 : f32 to vector<8x32xf32>
    %17 = arith.select %15, %10, %16 : vector<8x32xi1>, vector<8x32xf32>
    %cst_8 = arith.constant dense<0.000000e+00> : vector<8xf32>
    %18 = vector.multi_reduction <add>, %17, %cst_8 [1] : vector<8x32xf32> to vector<8xf32>
    %19 = vector.shape_cast %18 : vector<8xf32> to vector<8x1xf32>
    %20 = arith.divf %19, %12 : vector<8x1xf32>
    %cst_9 = arith.constant 0.896774172 : f32
    %21 = vector.broadcast %cst_9 : f32 to vector<8x1xf32>
    %22 = arith.mulf %21, %20 : vector<8x1xf32>
    %cst_10 = arith.constant 0.0032258064 : f32
    %23 = vector.broadcast %cst_10 : f32 to vector<8x1xf32>
    %24 = arith.addf %23, %22 : vector<8x1xf32>
    %cst_11 = arith.constant 1.17549435E-38 : f32
    %cst_12 = arith.constant 1.000000e+00 : f32
    %25 = vector.broadcast %cst_11 : f32 to vector<8x1xf32>
    %26 = arith.maximumf %25, %24 : vector<8x1xf32>
    %27 = vector.broadcast %cst_12 : f32 to vector<8x1xf32>
    %28 = arith.minimumf %27, %26 : vector<8x1xf32>
    %29 = math.log %28 : vector<8x1xf32>
    %cst_13 = arith.constant 1.000000e+00 : f32
    %30 = vector.broadcast %cst_13 : f32 to vector<8x1xf32>
    %31 = arith.subf %30, %28 : vector<8x1xf32>
    %32 = arith.mulf %31, %31 : vector<8x1xf32>
    %cst_14 = arith.constant 0.000000e+00 : f32
    %33 = vector.broadcast %cst_14 : f32 to vector<8x1xf32>
    %34 = arith.subf %33, %5 : vector<8x1xf32>
    %35 = arith.mulf %34, %32 : vector<8x1xf32>
    %36 = arith.mulf %35, %29 : vector<8x1xf32>
    %c1_i32 = arith.constant 1 : i32
    %37 = arith.muli %arg0, %c1_i32 : i32
    %38 = arith.addi %37, %arg1 : i32
    %39 = tpu.iota {dimensions = array<i32: 0>} : vector<8x1xi32>
    %c8_i32 = arith.constant 8 : i32
    %40 = arith.muli %38, %c8_i32 : i32
    %41 = vector.broadcast %40 : i32 to vector<8x1xi32>
    %42 = arith.addi %39, %41 : vector<8x1xi32>
    %c12_i32 = arith.constant 12 : i32
    %43 = vector.broadcast %c12_i32 : i32 to vector<8x1xi32>
    %44 = arith.cmpi slt, %42, %43 : vector<8x1xi32>
    %cst_15 = arith.constant 0.000000e+00 : f32
    %45 = vector.broadcast %cst_15 : f32 to vector<8x1xf32>
    %46 = arith.select %44, %36, %45 : vector<8x1xi1>, vector<8x1xf32>
    %c0_16 = arith.constant 0 : index
    %c0_17 = arith.constant 0 : index
    %47 = vector.load %arg5[%c0_16, %c0_17] : memref<8x128xf32, #tpu.memory_space<vmem>>, vector<8x128xf32>
    %48 = vector.shape_cast %46 : vector<8x1xf32> to vector<1x8x1xf32>
    %cst_18 = arith.constant dense<0.000000e+00> : vector<1xf32>
    %49 = vector.multi_reduction <add>, %48, %cst_18 [1, 2] : vector<1x8x1xf32> to vector<1xf32>
    %50 = vector.shape_cast %49 : vector<1xf32> to vector<1x1x1xf32>
    %51 = vector.extract %50[0, 0, 0] : f32 from vector<1x1x1xf32>
    %cst_19 = arith.constant 0.0833333358 : f32
    %52 = arith.mulf %51, %cst_19 : f32
    %53 = vector.broadcast %52 : f32 to vector<8x128xf32>
    %54 = arith.addf %47, %53 : vector<8x128xf32>
    %c0_20 = arith.constant 0 : index
    %c0_21 = arith.constant 0 : index
    %55 = vector.load %arg5[%c0_20, %c0_21] : memref<8x128xf32, #tpu.memory_space<vmem>>, vector<8x128xf32>
    tpu.vector_store %arg5[%c0_20, %c0_21], %54 {strides = array<i32>} : memref<8x128xf32, #tpu.memory_space<vmem>>, vector<8x128xf32>,
    return
  }
  func.func @transform_0(%arg0: i32, %arg1: i32) -> (i32, i32) {
    %c1_i32 = arith.constant 1 : i32
    %0 = arith.muli %arg0, %c1_i32 : i32
    %1 = arith.addi %0, %arg1 : i32
    %c1_i32_0 = arith.constant 1 : i32
    %2 = arith.minsi %1, %c1_i32_0 : i32
    %c0_i32 = arith.constant 0 : i32
    %c0_i32_1 = arith.constant 0 : i32
    return %2, %c0_i32 : i32, i32
  }
  func.func @transform_1(%arg0: i32, %arg1: i32) -> (i32, i32) {
    %c1_i32 = arith.constant 1 : i32
    %0 = arith.muli %arg0, %c1_i32 : i32
    %1 = arith.addi %0, %arg1 : i32
    %c1_i32_0 = arith.constant 1 : i32
    %2 = arith.minsi %1, %c1_i32_0 : i32
    %c0_i32 = arith.constant 0 : i32
    %c0_i32_1 = arith.constant 0 : i32
    return %2, %c0_i32 : i32, i32
  }
  func.func @transform_2(%arg0: i32, %arg1: i32) -> (i32, i32) {
    %c1_i32 = arith.constant 1 : i32
    %0 = arith.muli %arg0, %c1_i32 : i32
    %1 = arith.addi %0, %arg1 : i32
    %c1_i32_0 = arith.constant 1 : i32
    %2 = arith.minsi %1, %c1_i32_0 : i32
    %c0_i32 = arith.constant 0 : i32
    %c0_i32_1 = arith.constant 0 : i32
    return %2, %c0_i32 : i32, i32
  }
  func.func @transform_3(%arg0: i32, %arg1: i32) -> (i32, i32) {
    %c0_i32 = arith.constant 0 : i32
    %c0_i32_0 = arith.constant 0 : i32
    return %arg0, %c0_i32 : i32, i32
  }
}

</mosaic_0001>

<llo_original>
// kernel: tpu_custom_call.1
$region0: #{tpu_custom_call.1}
  #allocation0 [shape = 'u32[]', space=smem, size = 0x4, offset = 0x4, fixed_abs, tag = 'smem constant byte address 0x4 - core index']
  #allocation1 [shape = 'u32[144,128]{1,0:T(1,128)}', space=vmem, size = 0x12000, scoped, tag = 'internal scratch']
  %s0 = inlined_call_operand.vmem [shape: f32[12,32], index: 0, kind: input, shape index: {}]
  %s1 = inlined_call_operand.vmem [shape: s32[12,1], index: 1, kind: input, shape index: {}]
  %s2 = inlined_call_operand.vmem [shape: f32[12,1], index: 2, kind: input, shape index: {}]
  %s3 = inlined_call_operand.hbm [shape: f32[16,128], index: 3, kind: output, shape index: {}]
  %s4 = sld [smem:[#allocation0]]
  $region49: #{tpu_custom_call.1} parent=0
    _
  %s6 = ssub.s32 1, %s4
  %s7 = scalar_select 0, %s6, %s4
  $region1: #{tpu_custom_call.1} parent=0
    #allocation2 [shape = 'u8[8192]{0}', space=vmem, size = 0x2000, scoped, tag = 'output window, operand 0']
    #allocation3 [shape = 's32[2]{0}', space=sflag, size = 0x8, scoped, tag = 'scoped memory for tpu_custom_call.1']
    %8 = vsyncpa [#allocation3], 0
    %s9 = scalar_lea.sflag [#allocation3], 1
    %10 = vsyncpa %s9, 0
    loop: start=0, step=1, limit=4
    $region2: #{tpu_custom_call.1} parent=1 // loop_pre_header
      _
    $region3: #{tpu_custom_call.1} parent=1 // loop_header
      %s12 = sphi 0, %s16
      %p13 = scmp.ge.s32.totalorder %s12, 4
      %s19 = sphi 0, %s31
      %s20 = sphi 0, %s27
      %s21 = sphi 0, %s19
      %s22 = sphi 0, %s20
      %s23 = sphi 0, %s21
      %s24 = sphi 0, %s22
      %s40 = sphi 0, %s42
      %s43 = sphi 0, %s40
      %s44 = sphi 0, %s43
      %s60 = sphi 0, %s44
      %s72 = sphi 0, %s74
      %s75 = sphi 0, %s72
      %s76 = sphi 0, %s75
      %s92 = sphi 0, %s76
      %s104 = sphi 0, %s106
      %s107 = sphi 0, %s104
      %s108 = sphi 0, %s107
      %s124 = sphi 0, %s108
      %s130 = sphi 0, %s132
      %s133 = sphi 0, %s130
      %s134 = sphi 0, %s133
      %s150 = sphi 0, %s134
    $region4: #{tpu_custom_call.1} parent=1 // loop_header_branch
      %15 = sbr.rel (%p13) target = $region8
    $region5: #{tpu_custom_call.1} parent=1 // loop_body
      %s17 = ssub.s32 %s12, 1
      %s18 = ssub.s32 %s12, 2
      %s25 = sadd.s32 1, %s20
      %p26 = scmp.ge.s32.totalorder %s25, 1
      %s27 = scalar_select %p26, 0, %s25
      %s28 = sadd.s32 1, %s19
      %s29 = scalar_select %p26, %s28, %s19
      %p30 = scmp.ge.s32.totalorder %s29, 2
      %s31 = scalar_select %p30, 0, %s29
      %s32 = sadd.s32 %s19, %s20
      %p33 = scmp.lt.s32.totalorder %s32, 1
      %s34 = scalar_select %p33, %s32, 1
      %s35 = sadd.s32 %s31, %s27
      %p36 = scmp.lt.s32.totalorder %s35, 1
      %s37 = scalar_select %p36, %s35, 1
      %s38 = ssub.s32 %s34, %s37
      %p39 = scmp.eq.s32.totalorder %s38, 0
      %s41 = sadd.s32 %s40, 1
      %s42 = scalar_select %p39, %s40, %s41
      %p45 = pneg %p39
      %p46 = scmp.eq.s32.totalorder %s12, 1
      %p47 = por %p45, %p46
      %p48 = scmp.ne.s32.totalorder %s40, %s43
      %p49 = scmp.eq.s32.totalorder %s12, 0
      %p50 = por %p48, %p49
      %p51 = scmp.ne.s32.totalorder %s40, %s43
      %p52 = scmp.eq.s32.totalorder %s17, 1
      %p53 = por %p51, %p52
      %p54 = scmp.ne.s32.totalorder %s43, %s44
      %p55 = scmp.eq.s32.totalorder %s17, 0
      %p56 = por %p54, %p55
      %p57 = scmp.ne.s32.totalorder %s43, %s44
      %p58 = scmp.eq.s32.totalorder %s18, 1
      %p59 = por %p57, %p58
      %p61 = scmp.ne.s32.totalorder %s44, %s60
      %p62 = scmp.eq.s32.totalorder %s18, 0
      %p63 = por %p61, %p62
      %s64 = sadd.s32 %s19, %s20
      %p65 = scmp.lt.s32.totalorder %s64, 1
      %s66 = scalar_select %p65, %s64, 1
      %s67 = sadd.s32 %s31, %s27
      %p68 = scmp.lt.s32.totalorder %s67, 1
      %s69 = scalar_select %p68, %s67, 1
      %s70 = ssub.s32 %s66, %s69
      %p71 = scmp.eq.s32.totalorder %s70, 0
      %s73 = sadd.s32 %s72, 1
      %s74 = scalar_select %p71, %s72, %s73
      %p77 = pneg %p71
      %p78 = scmp.eq.s32.totalorder %s12, 1
      %p79 = por %p77, %p78
      %p80 = scmp.ne.s32.totalorder %s72, %s75
      %p81 = scmp.eq.s32.totalorder %s12, 0
      %p82 = por %p80, %p81
      %p83 = scmp.ne.s32.totalorder %s72, %s75
      %p84 = scmp.eq.s32.totalorder %s17, 1
      %p85 = por %p83, %p84
      %p86 = scmp.ne.s32.totalorder %s75, %s76
      %p87 = scmp.eq.s32.totalorder %s17, 0
      %p88 = por %p86, %p87
      %p89 = scmp.ne.s32.totalorder %s75, %s76
      %p90 = scmp.eq.s32.totalorder %s18, 1
      %p91 = por %p89, %p90
      %p93 = scmp.ne.s32.totalorder %s76, %s92
      %p94 = scmp.eq.s32.totalorder %s18, 0
      %p95 = por %p93, %p94
      %s96 = sadd.s32 %s19, %s20
      %p97 = scmp.lt.s32.totalorder %s96, 1
      %s98 = scalar_select %p97, %s96, 1
      %s99 = sadd.s32 %s31, %s27
      %p100 = scmp.lt.s32.totalorder %s99, 1
      %s101 = scalar_select %p100, %s99, 1
      %s102 = ssub.s32 %s98, %s101
      %p103 = scmp.eq.s32.totalorder %s102, 0
      %s105 = sadd.s32 %s104, 1
      %s106 = scalar_select %p103, %s104, %s105
      %p109 = pneg %p103
      %p110 = scmp.eq.s32.totalorder %s12, 1
      %p111 = por %p109, %p110
      %p112 = scmp.ne.s32.totalorder %s104, %s107
      %p113 = scmp.eq.s32.totalorder %s12, 0
      %p114 = por %p112, %p113
      %p115 = scmp.ne.s32.totalorder %s104, %s107
      %p116 = scmp.eq.s32.totalorder %s17, 1
      %p117 = por %p115, %p116
      %p118 = scmp.ne.s32.totalorder %s107, %s108
      %p119 = scmp.eq.s32.totalorder %s17, 0
      %p120 = por %p118, %p119
      %p121 = scmp.ne.s32.totalorder %s107, %s108
      %p122 = scmp.eq.s32.totalorder %s18, 1
      %p123 = por %p121, %p122
      %p125 = scmp.ne.s32.totalorder %s108, %s124
      %p126 = scmp.eq.s32.totalorder %s18, 0
      %p127 = por %p125, %p126
      %s128 = ssub.s32 %s19, %s31
      %p129 = scmp.eq.s32.totalorder %s128, 0
      %s131 = sadd.s32 %s130, 1
      %s132 = scalar_select %p129, %s130, %s131
      %p135 = pneg %p129
      %p136 = scmp.eq.s32.totalorder %s12, 1
      %p137 = por %p135, %p136
      %p138 = scmp.ne.s32.totalorder %s130, %s133
      %p139 = scmp.eq.s32.totalorder %s12, 0
      %p140 = por %p138, %p139
      %p141 = scmp.ne.s32.totalorder %s130, %s133
      %p142 = scmp.eq.s32.totalorder %s17, 1
      %p143 = por %p141, %p142
      %p144 = scmp.ne.s32.totalorder %s133, %s134
      %p145 = scmp.eq.s32.totalorder %s17, 0
      %p146 = por %p144, %p145
      %p147 = scmp.ne.s32.totalorder %s133, %s134
      %p148 = scmp.eq.s32.totalorder %s18, 1
      %p149 = por %p147, %p148
      %p151 = scmp.ne.s32.totalorder %s134, %s150
      %p152 = scmp.eq.s32.totalorder %s18, 0
      %p153 = por %p151, %p152
      %p154 = scmp.le.s32.totalorder 1, %s12
      %p155 = scmp.lt.s32.totalorder %s12, 3
      %p156 = pnand %p154, %p155
      %p157 = pneg %p156
      // Predicated region
      $region9: #{tpu_custom_call.1} parent=5 // pred_check
        _
      $region10: #{tpu_custom_call.1} parent=5 // pred_check_branch
        %159 = sbr.rel (%p156) target = $region12
      $region11: #{tpu_custom_call.1} parent=5 // pred_region
        %s160 = ssub.s32 %s12, 1
      $region12: #{tpu_custom_call.1} parent=5 // pred_fallthru
        _
      %p161 = scmp.lt.s32.totalorder %s12, 2
      // Predicated region
      $region13: #{tpu_custom_call.1} parent=5 // pred_check
        %p162 = pneg %p161
      $region14: #{tpu_custom_call.1} parent=5 // pred_check_branch
        %164 = sbr.rel (%p162) target = $region16
      $region15: #{tpu_custom_call.1} parent=5 // pred_region
        // Predicated region
        $region17: #{tpu_custom_call.1} parent=15 // pred_check
          %p165 = pneg %p50
        $region18: #{tpu_custom_call.1} parent=15 // pred_check_branch
          %167 = sbr.rel (%p165) target = $region20
        $region19: #{tpu_custom_call.1} parent=15 // pred_region
          %s168 = sadd.s32 %s19, %s20
          %p169 = scmp.lt.s32.totalorder %s168, 1
          %s170 = scalar_select %p169, %s168, 1
          %p171 = scmp.lt.s32.totalorder %s170, 1
          %s172 = scalar_select %p171, %s170, 1
          %s173 = smul.addr %s172, 8
          %s174 = scalar_lea.vmem %s0, %s173
          %s175 = sadd.s32 %s19, %s20
          %p176 = scmp.lt.s32.totalorder %s175, 1
          %s177 = scalar_select %p176, %s175, 1
        $region20: #{tpu_custom_call.1} parent=15 // pred_fallthru
          _
        // Predicated region
        $region21: #{tpu_custom_call.1} parent=15 // pred_check
          %p178 = pneg %p82
        $region22: #{tpu_custom_call.1} parent=15 // pred_check_branch
          %180 = sbr.rel (%p178) target = $region24
        $region23: #{tpu_custom_call.1} parent=15 // pred_region
          %s181 = sadd.s32 %s19, %s20
          %p182 = scmp.lt.s32.totalorder %s181, 1
          %s183 = scalar_select %p182, %s181, 1
          %p184 = scmp.lt.s32.totalorder %s183, 1
          %s185 = scalar_select %p184, %s183, 1
          %s186 = smul.addr %s185, 8
          %s187 = scalar_lea.vmem %s1, %s186
          %s188 = sadd.s32 %s19, %s20
          %p189 = scmp.lt.s32.totalorder %s188, 1
          %s190 = scalar_select %p189, %s188, 1
        $region24: #{tpu_custom_call.1} parent=15 // pred_fallthru
          _
        // Predicated region
        $region25: #{tpu_custom_call.1} parent=15 // pred_check
          %p191 = pneg %p114
        $region26: #{tpu_custom_call.1} parent=15 // pred_check_branch
          %193 = sbr.rel (%p191) target = $region28
        $region27: #{tpu_custom_call.1} parent=15 // pred_region
          %s194 = sadd.s32 %s19, %s20
          %p195 = scmp.lt.s32.totalorder %s194, 1
          %s196 = scalar_select %p195, %s194, 1
          %p197 = scmp.lt.s32.totalorder %s196, 1
          %s198 = scalar_select %p197, %s196, 1
          %s199 = smul.addr %s198, 8
          %s200 = scalar_lea.vmem %s2, %s199
          %s201 = sadd.s32 %s19, %s20
          %p202 = scmp.lt.s32.totalorder %s201, 1
          %s203 = scalar_select %p202, %s201, 1
        $region28: #{tpu_custom_call.1} parent=15 // pred_fallthru
          _
      $region16: #{tpu_custom_call.1} parent=5 // pred_fallthru
        _
      %p204 = scmp.le.s32.totalorder 1, %s12
      %p205 = scmp.lt.s32.totalorder %s12, 3
      %p206 = pnand %p204, %p205
      %p207 = pneg %p206
      // Predicated region
      $region29: #{tpu_custom_call.1} parent=5 // pred_check
        _
      $region30: #{tpu_custom_call.1} parent=5 // pred_check_branch
        %209 = sbr.rel (%p206) target = $region32
      $region31: #{tpu_custom_call.1} parent=5 // pred_region
        %s210 = ssub.s32 %s12, 1
        %s211 = sadd.s32 %s21, %s22
        %p212 = scmp.lt.s32.totalorder %s211, 1
        %s213 = scalar_select %p212, %s211, 1
        %p214 = scmp.lt.s32.totalorder %s213, 1
        %s215 = scalar_select %p214, %s213, 1
        %s216 = smul.addr %s215, 8
        %s217 = scalar_lea.vmem %s0, %s216
        %p218 = pneg %p56
        %p219 = pneg %p53
        %s220 = sadd.s32 %s21, %s22
        %p221 = scmp.lt.s32.totalorder %s220, 1
        %s222 = scalar_select %p221, %s220, 1
        %p223 = scmp.lt.s32.totalorder %s222, 1
        %s224 = scalar_select %p223, %s222, 1
        %s225 = smul.addr %s224, 8
        %s226 = scalar_lea.vmem %s1, %s225
        %p227 = pneg %p88
        %p228 = pneg %p85
        %s229 = sadd.s32 %s21, %s22
        %p230 = scmp.lt.s32.totalorder %s229, 1
        %s231 = scalar_select %p230, %s229, 1
        %p232 = scmp.lt.s32.totalorder %s231, 1
        %s233 = scalar_select %p232, %s231, 1
        %s234 = smul.addr %s233, 8
        %s235 = scalar_lea.vmem %s2, %s234
        %p236 = pneg %p120
        %p237 = pneg %p117
        %p238 = pneg %p146
        %p239 = pneg %p143
        %s240 = sand.u32 %s133, 1
        %s241 = scalar_lea.sflag [#allocation3], %s240
        %s242 = sand.u32 %s133, 1
        %s243 = smul.addr %s242, 8
        %s244 = scalar_lea.vmem [#allocation2], %s243
        %s245 = sadd.s32 %s21, %s22
        %p246 = scmp.lt.s32.totalorder %s245, 1
        %s247 = scalar_select %p246, %s245, 1
        %p248 = scmp.lt.s32.totalorder %s247, 1
        %s249 = scalar_select %p248, %s247, 1
        %s250 = smul.addr %s249, 8
        %s251 = scalar_lea.vmem %s0, %s250
        %s252 = sadd.s32 %s21, %s22
        %p253 = scmp.lt.s32.totalorder %s252, 1
        %s254 = scalar_select %p253, %s252, 1
        %s255 = sadd.s32 %s21, %s22
        %p256 = scmp.lt.s32.totalorder %s255, 1
        %s257 = scalar_select %p256, %s255, 1
        %p258 = scmp.lt.s32.totalorder %s257, 1
        %s259 = scalar_select %p258, %s257, 1
        %s260 = smul.addr %s259, 8
        %s261 = scalar_lea.vmem %s1, %s260
        %s262 = sadd.s32 %s21, %s22
        %p263 = scmp.lt.s32.totalorder %s262, 1
        %s264 = scalar_select %p263, %s262, 1
        %s265 = sadd.s32 %s21, %s22
        %p266 = scmp.lt.s32.totalorder %s265, 1
        %s267 = scalar_select %p266, %s265, 1
        %p268 = scmp.lt.s32.totalorder %s267, 1
        %s269 = scalar_select %p268, %s267, 1
        %s270 = smul.addr %s269, 8
        %s271 = scalar_lea.vmem %s2, %s270
        %s272 = sadd.s32 %s21, %s22
        %p273 = scmp.lt.s32.totalorder %s272, 1
        %s274 = scalar_select %p273, %s272, 1
        %p275 = scmp.eq.s32.totalorder %s22, 0
        // Predicated region
        $region33: #{tpu_custom_call.1} parent=31 // pred_check
          %p276 = pneg %p275
        $region34: #{tpu_custom_call.1} parent=31 // pred_check_branch
          %278 = sbr.rel (%p276) target = $region36
        $region35: #{tpu_custom_call.1} parent=31 // pred_region
          %279 = vst [vmem:[%s244] sm:$0xff] 0.0
        $region36: #{tpu_custom_call.1} parent=31 // pred_fallthru
          _
        %v280 = vld [vmem:[%s251] sm:$0xff]
        %v281 = vld [vmem:[%s261] sm:$0xff]
        %v282 = vld [vmem:[%s271] sm:$0xff]
        %vm283 = vcmask 261120
        %v284 = vsel %vm283, %v280, -inf
        %285 = vmax.xlane.f32.xlu0 %v284
        %v286 = vpop.xlane.xlu0 %285
        %v287 = vsub.f32 %v280, %v286
        %v288 = vmul.f32 %v287, 1.442695
        %v289 = vpow.pop %v288
        %v290 = vsel %vm283, %v289, 0.0
        %291 = vadd.xlane.f32.xlu0 %v290
        %v292 = vpop.xlane.xlu0 %291
        %v293 = vlaneseq
        %v294 = vand.u32 %v293, 127
        %295 = vset.pattern.permute.xlu0 0
        %296 = vperm.xlu0 %295, %v281
        %v297 = vpop.permute.xlu0 %296
        %vm298 = vcmp.eq.s32.totalorder %v294, %v297
        %v299 = vsel %vm298, %v289, 0.0
        %v300 = vsel %vm283, %v299, 0.0
        %301 = vadd.xlane.f32.xlu0 %v300
        %v302 = vpop.xlane.xlu0 %301
        %v303 = vrcp.pop %v292
        %v304 = vmul.f32 %v302, %v303
        %v305 = vmul.f32 %v304, 0.8967742
        %v306 = vadd.f32 %v305, 0.0032258064
        %v307 = vmax.f32 %v306, 1.1754944e-38
        %v308 = vmin.f32 %v307, 1.0
        %v309 = vlog2.pop %v308
        %v310 = vmul.f32 %v309, 0.6931472
        %v311 = vsub.f32 1.0, %v308
        %v312 = vmul.f32 %v311, %v311
        %v313 = vsub.f32 0.0, %v282
        %v314 = vmul.f32 %v313, %v312
        %v315 = vmul.f32 %v314, %v310
        %s316 = sadd.s32 %s21, %s22
        %v317 = vlaneseq
        %v318 = vshrl.u32 %v317, 7
        %s319 = smul.u32 %s316, 8
        %v320 = vstv %s319
        %v321 = vadd.s32 %v318, %v320
        %vm322 = vcmp.lt.s32.totalorder %v321, 12
        %v323 = vsel %vm322, %v315, 0.0
        %v324 = vld [vmem:[%s244] sm:$0xff]
        %vm325 = vcmask 7168
        %v326 = vsel %vm325, %v323, 0.0
        %327 = vadd.xlane.f32.xlu0 %v326
        %v328 = vpop.xlane.xlu0 %327
        %v329 = vrot.slane %v328, 4
        %v330 = vadd.f32 %v328, %v329
        %v331 = vrot.slane %v330, 2
        %v332 = vadd.f32 %v330, %v331
        %v333 = vrot.slane %v332, 1
        %v334 = vadd.f32 %v332, %v333
        %s335 = vtos %v334
        %s336 = smul.f32 %s335, 0.083333336
        %v337 = vstv %s336
        %v338 = vadd.f32 %v324, %v337
        %339 = vst [vmem:[%s244] sm:$0xff] %v338
        %s340 = sand.u32 %s133, 1
        %s341 = scalar_lea.sflag [#allocation3], %s340
        %s342 = sand.u32 %s133, 1
        %s343 = smul.addr %s342, 8
        %s344 = scalar_lea.vmem [#allocation2], %s343
        // Predicated region
        $region37: #{tpu_custom_call.1} parent=31 // pred_check
          %p345 = pneg %p143
        $region38: #{tpu_custom_call.1} parent=31 // pred_check_branch
          %347 = sbr.rel (%p345) target = $region40
        $region39: #{tpu_custom_call.1} parent=31 // pred_region
          %s349 = ssub.s32 128, 128
          %350 = vsyncadd %s341, %s349
          %s351 = smul.addr %s21, 128
          %s352 = scalar_lea.hbm %s3, %s351
          %s354 = sshll.u32 %s344, 4
          %s355 = int_to_ptr.vmem [resolvable:$true] %s354
          %357 = dma.vmem_to_hbm [thread:$0]  %s355, 128, %s352, %s341
        $region40: #{tpu_custom_call.1} parent=31 // pred_fallthru
          _
      $region32: #{tpu_custom_call.1} parent=5 // pred_fallthru
        _
      %p358 = scmp.le.s32.totalorder 2, %s12
      // Predicated region
      $region41: #{tpu_custom_call.1} parent=5 // pred_check
        %p359 = pneg %p358
      $region42: #{tpu_custom_call.1} parent=5 // pred_check_branch
        %361 = sbr.rel (%p359) target = $region44
      $region43: #{tpu_custom_call.1} parent=5 // pred_region
        %s362 = ssub.s32 %s12, 2
        // Predicated region
        $region45: #{tpu_custom_call.1} parent=43 // pred_check
          %p363 = pneg %p149
        $region46: #{tpu_custom_call.1} parent=43 // pred_check_branch
          %365 = sbr.rel (%p363) target = $region48
        $region47: #{tpu_custom_call.1} parent=43 // pred_region
          %s366 = sand.u32 %s134, 1
          %s367 = scalar_lea.sflag [#allocation3], %s366
          %s368 = sand.u32 %s134, 1
          %s369 = smul.addr %s368, 8
          %s370 = scalar_lea.vmem [#allocation2], %s369
          %371 = dma.done %s367, 128
        $region48: #{tpu_custom_call.1} parent=43 // pred_fallthru
          _
      $region44: #{tpu_custom_call.1} parent=5 // pred_fallthru
        _
    $region6: #{tpu_custom_call.1} parent=1 // loop_footer
      %s16 = sadd.s32 1, %s12
    $region7: #{tpu_custom_call.1} parent=1 // loop_footer_branch
      %11 = sbr.rel target = $region3
    $region8: #{tpu_custom_call.1} parent=1 // loop_exit
      _
    %372 = vsyncpa [#allocation3], 1
    %s373 = scalar_lea.sflag [#allocation3], 1
    %374 = vsyncpa %s373, 1

</llo_original>
